<compile_context>
chip_gen: v7x
topology: tpu7x:2x2x1
jax: 0.10.0
libtpu: 0.0.40
codegen_flags: <defaults>
</compile_context>

<pallas_src>
import jax
import jax.numpy as jnp
from jax.experimental import pallas as pl
from jax.experimental.pallas import tpu as pltpu

LEAKY_SLOPE = 0.01  # nn.LeakyReLU default negative_slope
LANE = 128          # TPU vreg lane width


def _round_up(x, m):
    return ((x + m - 1) // m) * m


def _leaky_relu(x):
    return jnp.where(x >= 0, x, LEAKY_SLOPE * x)


def _continue_kernel(x_ref, w1_ref, b1_ref, w2_ref, b2_ref, w3_ref, b3_ref, o_ref):
    # Hoist bias loads once per tile (JAX does not CSE broadcast_in_dim).
    b1 = b1_ref[...]
    b2 = b2_ref[...]
    b3 = b3_ref[...]
    # Single intentional bf16 cast point (input arrives as f32).
    x = x_ref[...].astype(jnp.bfloat16)
    # Matmuls: bf16 MXU inputs, f32 accumulation.  Elementwise stays f32.
    h = jnp.dot(x, w1_ref[...], preferred_element_type=jnp.float32) + b1
    h = _leaky_relu(h)
    h = jnp.dot(h.astype(jnp.bfloat16), w2_ref[...],
                preferred_element_type=jnp.float32) + b2
    h = _leaky_relu(h)
    h = jnp.dot(h.astype(jnp.bfloat16), w3_ref[...],
                preferred_element_type=jnp.float32) + b3
    # Lane-dense (128-multiple) unmasked store.
    o_ref[...] = jnp.maximum(h, 0.0).astype(o_ref.dtype)


def _discrete_kernel(x_ref, w_ref, b_ref, o_ref):
    b = b_ref[...]
    x = x_ref[...].astype(jnp.bfloat16)
    h = jnp.dot(x, w_ref[...], preferred_element_type=jnp.float32) + b
    o_ref[...] = h.astype(o_ref.dtype)


class SamplerPallas:
    """Pallas port of Sampler. Parameters are deterministic synthetic values."""

    def __init__(self, input_dimension, class_num, config, key, max_tile_b=2048):
        self.input_dimension = input_dimension
        self.hidden_input_dimension = config["hidden_input_dimension"]
        self.hidden_output_dimension = config["hidden_output_dimension"]
        self.output_dimension = config["output_dimension"]
        self.class_num = class_num
        self.max_tile_b = max_tile_b

        # Lane-padded OUTPUT feature sizes only (multiples of 128).  The K dim
        # of the first layer / discrete layer stays at the real input_dimension.
        self.h1_pad = _round_up(self.hidden_input_dimension, LANE)
        self.h2_pad = _round_up(self.hidden_output_dimension, LANE)
        self.out_pad = _round_up(self.output_dimension, LANE)
        self.cls_pad = _round_up(self.class_num, LANE)

        keys = jax.random.split(key, 8)

        def linear_params(kw, kb, fan_in, fan_out):
            # PyTorch nn.Linear init: U(-1/sqrt(fan_in), 1/sqrt(fan_in)).
            bound = 1.0 / float(fan_in) ** 0.5
            # Stored already transposed: (in, out).
            w = jax.random.uniform(kw, (fan_in, fan_out), jnp.float32, -bound, bound)
            b = jax.random.uniform(kb, (1, fan_out), jnp.float32, -bound, bound)
            return w, b

        def pad_params(w, b, in_pad, out_pad):
            wp = jnp.zeros((in_pad, out_pad), jnp.float32)
            wp = wp.at[: w.shape[0], : w.shape[1]].set(w)
            bp = jnp.zeros((1, out_pad), jnp.float32)
            bp = bp.at[:, : b.shape[1]].set(b)
            # Weights bf16 (halves weight DMA, native MXU dtype); bias stays f32.
            return wp.astype(jnp.bfloat16), bp

        # Unpadded f32 copies kept for the reference check.
        self.w1_f32, self.b1_f32 = linear_params(
            keys[0], keys[1], self.input_dimension, self.hidden_input_dimension)
        self.w2_f32, self.b2_f32 = linear_params(
            keys[2], keys[3], self.hidden_input_dimension, self.hidden_output_dimension)
        self.w3_f32, self.b3_f32 = linear_params(
            keys[4], keys[5], self.hidden_output_dimension, self.output_dimension)
        self.wd_f32, self.bd_f32 = linear_params(
            keys[6], keys[7], self.input_dimension, self.class_num)

        # K of layer 1 / discrete layer = real input_dimension (no padding).
        self.w1, self.b1 = pad_params(self.w1_f32, self.b1_f32,
                                      self.input_dimension, self.h1_pad)
        self.w2, self.b2 = pad_params(self.w2_f32, self.b2_f32,
                                      self.h1_pad, self.h2_pad)
        self.w3, self.b3 = pad_params(self.w3_f32, self.b3_f32,
                                      self.h2_pad, self.out_pad)
        self.wd, self.bd = pad_params(self.wd_f32, self.bd_f32,
                                      self.input_dimension, self.cls_pad)

    # ---- batch tiling helper -------------------------------------------------
    def _tiling(self, B):
        """Pick (tile_b, grid) so that per-step overhead is amortized, both TCs
        are used on v7x (grid >= 2 when B allows), and batch padding is minimal
        (last block may be partial; Pallas masks OOB output rows)."""
        if B <= 8:
            # Block = full batch dim (always legal, even if < 8 rows).
            return B, 1
        n_tiles = max(2, pl.cdiv(B, self.max_tile_b))
        tile_b = _round_up(pl.cdiv(B, n_tiles), 8)
        grid = pl.cdiv(B, tile_b)
        return tile_b, grid

    @staticmethod
    def _resident_spec(shape):
        # Constant index_map: block fetched once, stays VMEM-resident.
        return pl.BlockSpec(shape, lambda i: (0, 0))

    # ---- continue branch -----------------------------------------------------
    def _continue(self, x):
        B, K = x.shape
        tile_b, grid = self._tiling(B)
        out = pl.pallas_call(
            _continue_kernel,
            out_shape=jax.ShapeDtypeStruct((B, self.out_pad), jnp.float32),
            grid=(grid,),
            in_specs=[
                # Last dim == full array dim -> legal without 128 padding.
                pl.BlockSpec((tile_b, K), lambda i: (i, 0)),
                self._resident_spec(self.w1.shape),
                self._resident_spec(self.b1.shape),
                self._resident_spec(self.w2.shape),
                self._resident_spec(self.b2.shape),
                self._resident_spec(self.w3.shape),
                self._resident_spec(self.b3.shape),
            ],
            out_specs=pl.BlockSpec((tile_b, self.out_pad), lambda i: (i, 0)),
            compiler_params=pltpu.CompilerParams(
                dimension_semantics=("parallel",)),
        )(x, self.w1, self.b1, self.w2, self.b2, self.w3, self.b3)
        return out[:, : self.output_dimension]

    # ---- discrete branch -----------------------------------------------------
    def _discrete(self, x):
        B, K = x.shape
        tile_b, grid = self._tiling(B)
        out = pl.pallas_call(
            _discrete_kernel,
            out_shape=jax.ShapeDtypeStruct((B, self.cls_pad), jnp.float32),
            grid=(grid,),
            in_specs=[
                pl.BlockSpec((tile_b, K), lambda i: (i, 0)),
                self._resident_spec(self.wd.shape),
                self._resident_spec(self.bd.shape),
            ],
            out_specs=pl.BlockSpec((tile_b, self.cls_pad), lambda i: (i, 0)),
            compiler_params=pltpu.CompilerParams(
                dimension_semantics=("parallel",)),
        )(x, self.wd, self.bd)
        return out[:, : self.class_num]

    def __call__(self, x, is_class):
        # `is_class` is a Python bool in the reference module -> branch at trace time.
        if is_class:
            return self._discrete(x)
        else:
            return self._continue(x)


# --------------------------- references --------------------------------------
def _reference_bf16(sampler, x, is_class):
    """Mirrors the kernel numerics (bf16 matmul inputs, f32 accum)."""
    xb = x.astype(jnp.bfloat16)
    if is_class:
        h = jnp.dot(xb, sampler.wd, preferred_element_type=jnp.float32) + sampler.bd
        return h[:, : sampler.class_num]
    h = jnp.dot(xb, sampler.w1, preferred_element_type=jnp.float32) + sampler.b1
    h = _leaky_relu(h)
    h = jnp.dot(h.astype(jnp.bfloat16), sampler.w2,
                preferred_element_type=jnp.float32) + sampler.b2
    h = _leaky_relu(h)
    h = jnp.dot(h.astype(jnp.bfloat16), sampler.w3,
                preferred_element_type=jnp.float32) + sampler.b3
    return jnp.maximum(h, 0.0)[:, : sampler.output_dimension]


def _reference_f32(sampler, x, is_class):
    """Pure f32 reference on unpadded params (module semantics)."""
    if is_class:
        return x @ sampler.wd_f32 + sampler.bd_f32
    h = _leaky_relu(x @ sampler.w1_f32 + sampler.b1_f32)
    h = _leaky_relu(h @ sampler.w2_f32 + sampler.b2_f32)
    return jnp.maximum(h @ sampler.w3_f32 + sampler.b3_f32, 0.0)


if __name__ == "__main__":
    key = jax.random.PRNGKey(0)
    k_param, k_x, k_x2 = jax.random.split(key, 3)

    # Small shapes consistent with the module's forward.
    batch = 8
    input_dimension = 32
    class_num = 16
    config = {
        "hidden_input_dimension": 64,
        "hidden_output_dimension": 64,
        "output_dimension": 32,
    }

    sampler = SamplerPallas(input_dimension, class_num, config, k_param)
    x = jax.random.normal(k_x, (batch, input_dimension), jnp.float32)

    # Continuous branch
    y_cont = sampler(x, is_class=False)
    jax.block_until_ready(y_cont)
    assert y_cont.shape == (batch, config["output_dimension"])
    assert jnp.allclose(y_cont, _reference_bf16(sampler, x, False), atol=1e-3, rtol=1e-3)
    assert jnp.allclose(y_cont, _reference_f32(sampler, x, False), atol=5e-2, rtol=5e-2)

    # Discrete branch
    y_disc = sampler(x, is_class=True)
    jax.block_until_ready(y_disc)
    assert y_disc.shape == (batch, class_num)
    assert jnp.allclose(y_disc, _reference_bf16(sampler, x, True), atol=1e-3, rtol=1e-3)
    assert jnp.allclose(y_disc, _reference_f32(sampler, x, True), atol=5e-2, rtol=5e-2)

    # Awkward batch size -> exercises grid=2 + partial last block (no pad blowup).
    batch2 = 200
    x2 = jax.random.normal(k_x2, (batch2, input_dimension), jnp.float32)
    y2 = sampler(x2, is_class=False)
    jax.block_until_ready(y2)
    assert y2.shape == (batch2, config["output_dimension"])
    assert jnp.allclose(y2, _reference_bf16(sampler, x2, False), atol=1e-3, rtol=1e-3)
    assert jnp.allclose(y2, _reference_f32(sampler, x2, False), atol=5e-2, rtol=5e-2)

    print("KERNEL_OK")
</pallas_src>

<mosaic_0001>
module attributes {stable_mosaic.version = 11 : i64} {
  func.func @_continue_kernel(%arg0: i32, %arg1: memref<8x32xf32, #tpu.memory_space<vmem>>, %arg2: memref<32x128xbf16, #tpu.memory_space<vmem>>, %arg3: memref<1x128xf32, #tpu.memory_space<vmem>>, %arg4: memref<128x128xbf16, #tpu.memory_space<vmem>>, %arg5: memref<1x128xf32, #tpu.memory_space<vmem>>, %arg6: memref<128x128xbf16, #tpu.memory_space<vmem>>, %arg7: memref<1x128xf32, #tpu.memory_space<vmem>>, %arg8: memref<8x128xf32, #tpu.memory_space<vmem>>) attributes {dimension_semantics = [#tpu.dimension_semantics<parallel>], iteration_bounds = array<i64: 1>, scalar_prefetch = 0 : i64, scratch_operands = 0 : i64, tpu.core_type = #tpu.core_type<tc>, window_params = [{transform_indices = @transform_0, window_bounds = array<i64: 8, 32>}, {pipeline_mode = #tpu.pipeline_mode<synchronous>, transform_indices = @transform_1, window_bounds = array<i64: 32, 128>}, {pipeline_mode = #tpu.pipeline_mode<synchronous>, transform_indices = @transform_2, window_bounds = array<i64: 1, 128>}, {pipeline_mode = #tpu.pipeline_mode<synchronous>, transform_indices = @transform_3, window_bounds = array<i64: 128, 128>}, {pipeline_mode = #tpu.pipeline_mode<synchronous>, transform_indices = @transform_4, window_bounds = array<i64: 1, 128>}, {pipeline_mode = #tpu.pipeline_mode<synchronous>, transform_indices = @transform_5, window_bounds = array<i64: 128, 128>}, {pipeline_mode = #tpu.pipeline_mode<synchronous>, transform_indices = @transform_6, window_bounds = array<i64: 1, 128>}, {transform_indices = @transform_7, window_bounds = array<i64: 8, 128>}]} {
    %c0 = arith.constant 0 : index
    %c0_0 = arith.constant 0 : index
    %0 = vector.load %arg3[%c0, %c0_0] : memref<1x128xf32, #tpu.memory_space<vmem>>, vector<1x128xf32>
    %c0_1 = arith.constant 0 : index
    %c0_2 = arith.constant 0 : index
    %1 = vector.load %arg5[%c0_1, %c0_2] : memref<1x128xf32, #tpu.memory_space<vmem>>, vector<1x128xf32>
    %c0_3 = arith.constant 0 : index
    %c0_4 = arith.constant 0 : index
    %2 = vector.load %arg7[%c0_3, %c0_4] : memref<1x128xf32, #tpu.memory_space<vmem>>, vector<1x128xf32>
    %c0_5 = arith.constant 0 : index
    %c0_6 = arith.constant 0 : index
    %3 = vector.load %arg1[%c0_5, %c0_6] : memref<8x32xf32, #tpu.memory_space<vmem>>, vector<8x32xf32>
    %4 = arith.truncf %3 : vector<8x32xf32> to vector<8x32xbf16>
    %c0_7 = arith.constant 0 : index
    %c0_8 = arith.constant 0 : index
    %5 = vector.load %arg2[%c0_7, %c0_8] : memref<32x128xbf16, #tpu.memory_space<vmem>>, vector<32x128xbf16>
    %cst = arith.constant dense<0.000000e+00> : vector<8x128xf32>
    %6 = tpu.matmul %4, %5, %cst {dimension_numbers = #tpu.dot_dimension_numbers<[1], [0], [0], [1], [0, 0, 1, 1], [], []>} : vector<8x32xbf16>, vector<32x128xbf16>, vector<8x128xf32> -> vector<8x128xf32>
    %7 = vector.broadcast %0 : vector<1x128xf32> to vector<8x128xf32>
    %8 = arith.addf %6, %7 : vector<8x128xf32>
    %cst_9 = arith.constant 0.000000e+00 : f32
    %9 = vector.broadcast %cst_9 : f32 to vector<8x128xf32>
    %10 = arith.cmpf oge, %8, %9 : vector<8x128xf32>
    %cst_10 = arith.constant 0.00999999977 : f32
    %11 = vector.broadcast %cst_10 : f32 to vector<8x128xf32>
    %12 = arith.mulf %11, %8 : vector<8x128xf32>
    %13 = arith.select %10, %8, %12 : vector<8x128xi1>, vector<8x128xf32>
    %14 = arith.truncf %13 : vector<8x128xf32> to vector<8x128xbf16>
    %c0_11 = arith.constant 0 : index
    %c0_12 = arith.constant 0 : index
    %15 = vector.load %arg4[%c0_11, %c0_12] : memref<128x128xbf16, #tpu.memory_space<vmem>>, vector<128x128xbf16>
    %cst_13 = arith.constant dense<0.000000e+00> : vector<8x128xf32>
    %16 = tpu.matmul %14, %15, %cst_13 {dimension_numbers = #tpu.dot_dimension_numbers<[1], [0], [0], [1], [0, 0, 1, 1], [], []>} : vector<8x128xbf16>, vector<128x128xbf16>, vector<8x128xf32> -> vector<8x128xf32>
    %17 = vector.broadcast %1 : vector<1x128xf32> to vector<8x128xf32>
    %18 = arith.addf %16, %17 : vector<8x128xf32>
    %cst_14 = arith.constant 0.000000e+00 : f32
    %19 = vector.broadcast %cst_14 : f32 to vector<8x128xf32>
    %20 = arith.cmpf oge, %18, %19 : vector<8x128xf32>
    %cst_15 = arith.constant 0.00999999977 : f32
    %21 = vector.broadcast %cst_15 : f32 to vector<8x128xf32>
    %22 = arith.mulf %21, %18 : vector<8x128xf32>
    %23 = arith.select %20, %18, %22 : vector<8x128xi1>, vector<8x128xf32>
    %24 = arith.truncf %23 : vector<8x128xf32> to vector<8x128xbf16>
    %c0_16 = arith.constant 0 : index
    %c0_17 = arith.constant 0 : index
    %25 = vector.load %arg6[%c0_16, %c0_17] : memref<128x128xbf16, #tpu.memory_space<vmem>>, vector<128x128xbf16>
    %cst_18 = arith.constant dense<0.000000e+00> : vector<8x128xf32>
    %26 = tpu.matmul %24, %25, %cst_18 {dimension_numbers = #tpu.dot_dimension_numbers<[1], [0], [0], [1], [0, 0, 1, 1], [], []>} : vector<8x128xbf16>, vector<128x128xbf16>, vector<8x128xf32> -> vector<8x128xf32>
    %27 = vector.broadcast %2 : vector<1x128xf32> to vector<8x128xf32>
    %28 = arith.addf %26, %27 : vector<8x128xf32>
    %cst_19 = arith.constant 0.000000e+00 : f32
    %29 = vector.broadcast %cst_19 : f32 to vector<8x128xf32>
    %30 = arith.maximumf %28, %29 : vector<8x128xf32>
    %c0_20 = arith.constant 0 : index
    %c0_21 = arith.constant 0 : index
    %31 = vector.load %arg8[%c0_20, %c0_21] : memref<8x128xf32, #tpu.memory_space<vmem>>, vector<8x128xf32>
    tpu.vector_store %arg8[%c0_20, %c0_21], %30 {strides = array<i32>} : memref<8x128xf32, #tpu.memory_space<vmem>>, vector<8x128xf32>,
    return
  }
  func.func @transform_0(%arg0: i32) -> (i32, i32) {
    %c0_i32 = arith.constant 0 : i32
    %c0_i32_0 = arith.constant 0 : i32
    return %arg0, %c0_i32 : i32, i32
  }
  func.func @transform_1(%arg0: i32) -> (i32, i32) {
    %c0_i32 = arith.constant 0 : i32
    %c0_i32_0 = arith.constant 0 : i32
    %c0_i32_1 = arith.constant 0 : i32
    return %c0_i32, %c0_i32_0 : i32, i32
  }
  func.func @transform_2(%arg0: i32) -> (i32, i32) {
    %c0_i32 = arith.constant 0 : i32
    %c0_i32_0 = arith.constant 0 : i32
    %c0_i32_1 = arith.constant 0 : i32
    return %c0_i32, %c0_i32_0 : i32, i32
  }
  func.func @transform_3(%arg0: i32) -> (i32, i32) {
    %c0_i32 = arith.constant 0 : i32
    %c0_i32_0 = arith.constant 0 : i32
    %c0_i32_1 = arith.constant 0 : i32
    return %c0_i32, %c0_i32_0 : i32, i32
  }
  func.func @transform_4(%arg0: i32) -> (i32, i32) {
    %c0_i32 = arith.constant 0 : i32
    %c0_i32_0 = arith.constant 0 : i32
    %c0_i32_1 = arith.constant 0 : i32
    return %c0_i32, %c0_i32_0 : i32, i32
  }
  func.func @transform_5(%arg0: i32) -> (i32, i32) {
    %c0_i32 = arith.constant 0 : i32
    %c0_i32_0 = arith.constant 0 : i32
    %c0_i32_1 = arith.constant 0 : i32
    return %c0_i32, %c0_i32_0 : i32, i32
  }
  func.func @transform_6(%arg0: i32) -> (i32, i32) {
    %c0_i32 = arith.constant 0 : i32
    %c0_i32_0 = arith.constant 0 : i32
    %c0_i32_1 = arith.constant 0 : i32
    return %c0_i32, %c0_i32_0 : i32, i32
  }
  func.func @transform_7(%arg0: i32) -> (i32, i32) {
    %c0_i32 = arith.constant 0 : i32
    %c0_i32_0 = arith.constant 0 : i32
    return %arg0, %c0_i32 : i32, i32
  }
}

</mosaic_0001>

<llo_original>
// kernel: tpu_custom_call.1
$region0: #{tpu_custom_call.1}
  #allocation0 [shape = 'u32[]', space=smem, size = 0x4, offset = 0x4, fixed_abs, tag = 'smem constant byte address 0x4 - core index']
  #allocation1 [shape = 'u32[144,128]{1,0:T(1,128)}', space=vmem, size = 0x12000, scoped, tag = 'internal scratch']
  %s0 = inlined_call_operand.hbm [shape: f32[8,32], index: 0, kind: input, shape index: {}]
  %s1 = inlined_call_operand.hbm [shape: bf16[32,128], index: 1, kind: input, shape index: {}]
  %s2 = inlined_call_operand.vmem [shape: f32[1,128], index: 2, kind: input, shape index: {}]
  %s3 = inlined_call_operand.hbm [shape: bf16[128,128], index: 3, kind: input, shape index: {}]
  %s4 = inlined_call_operand.vmem [shape: f32[1,128], index: 4, kind: input, shape index: {}]
  %s5 = inlined_call_operand.hbm [shape: bf16[128,128], index: 5, kind: input, shape index: {}]
  %s6 = inlined_call_operand.vmem [shape: f32[1,128], index: 6, kind: input, shape index: {}]
  %s7 = inlined_call_operand.hbm [shape: f32[8,128], index: 7, kind: output, shape index: {}]
  %s8 = sld [smem:[#allocation0]]
  $region54: #{tpu_custom_call.1} parent=0
    _
  %s10 = ssub.s32 1, %s8
  %s11 = scalar_select 0, %s10, %s8
  $region1: #{tpu_custom_call.1} parent=0
    #allocation2 [shape = 'u8[4096]{0}', space=vmem, size = 0x1000, scoped, tag = 'input window, operand 0, single buffered']
    #allocation3 [shape = 's32[1]{0}', space=sflag, size = 0x4, scoped, tag = 'scoped memory for tpu_custom_call.1']
    #allocation4 [shape = 's32[1]{0}', space=sflag, size = 0x4, scoped, tag = 'scoped memory for tpu_custom_call.1']
    #allocation5 [shape = 'u8[8192]{0}', space=vmem, size = 0x2000, scoped, tag = 'input window, operand 1, single buffered']
    #allocation6 [shape = 's32[1]{0}', space=sflag, size = 0x4, scoped, tag = 'scoped memory for tpu_custom_call.1']
    #allocation7 [shape = 'u8[32768]{0}', space=vmem, size = 0x8000, scoped, tag = 'input window, operand 3, single buffered']
    #allocation8 [shape = 'u8[32768]{0}', space=vmem, size = 0x8000, scoped, tag = 'input window, operand 5, single buffered']
    #allocation9 [shape = 's32[1]{0}', space=sflag, size = 0x4, scoped, tag = 'scoped memory for tpu_custom_call.1']
    #allocation10 [shape = 'u8[4096]{0}', space=vmem, size = 0x1000, scoped, tag = 'output window, operand 0, single buffered']
    %12 = vsyncpa [#allocation3], 0
    %13 = vsyncpa [#allocation6], 0
    %14 = vsyncpa [#allocation9], 0
    %15 = vsyncpa [#allocation4], 0
    // Predicated region
    $region2: #{tpu_custom_call.1} parent=1 // pred_check
      _
    $region3: #{tpu_custom_call.1} parent=1 // pred_check_branch
      %17 = sbr.rel (0) target = $region5
    $region4: #{tpu_custom_call.1} parent=1 // pred_region
      %s19 = ssub.s32 128, 128
      %20 = vsyncadd [#allocation3], %s19
      %s22 = sshll.u32 [#allocation2], 4
      %s23 = int_to_ptr.vmem [resolvable:$true] %s22
      %25 = dma.hbm_to_vmem [thread:$0]  %s0, 128, %s23, [#allocation3]
    $region5: #{tpu_custom_call.1} parent=1 // pred_fallthru
      _
    // Predicated region
    $region6: #{tpu_custom_call.1} parent=1 // pred_check
      _
    $region7: #{tpu_custom_call.1} parent=1 // pred_check_branch
      %27 = sbr.rel (0) target = $region9
    $region8: #{tpu_custom_call.1} parent=1 // pred_region
      %s29 = ssub.s32 256, 256
      %30 = vsyncadd [#allocation6], %s29
      %s31 = sshll.u32 [#allocation5], 4
      %s32 = int_to_ptr.vmem [resolvable:$true] %s31
      %37 = dma.hbm_to_vmem [thread:$0]  %s1, 256, %s32, [#allocation6], 64, 64, 4
    $region9: #{tpu_custom_call.1} parent=1 // pred_fallthru
      _
    // Predicated region
    $region10: #{tpu_custom_call.1} parent=1 // pred_check
      _
    $region11: #{tpu_custom_call.1} parent=1 // pred_check_branch
      %39 = sbr.rel (0) target = $region13
    $region12: #{tpu_custom_call.1} parent=1 // pred_region
      _
    $region13: #{tpu_custom_call.1} parent=1 // pred_fallthru
      _
    // Predicated region
    $region14: #{tpu_custom_call.1} parent=1 // pred_check
      _
    $region15: #{tpu_custom_call.1} parent=1 // pred_check_branch
      %41 = sbr.rel (0) target = $region17
    $region16: #{tpu_custom_call.1} parent=1 // pred_region
      %s43 = ssub.s32 1024, 1024
      %44 = vsyncadd [#allocation6], %s43
      %s45 = sshll.u32 [#allocation7], 4
      %s46 = int_to_ptr.vmem [resolvable:$true] %s45
      %51 = dma.hbm_to_vmem [thread:$0]  %s3, 1024, %s46, [#allocation6], 64, 64, 4
    $region17: #{tpu_custom_call.1} parent=1 // pred_fallthru
      _
    // Predicated region
    $region18: #{tpu_custom_call.1} parent=1 // pred_check
      _
    $region19: #{tpu_custom_call.1} parent=1 // pred_check_branch
      %53 = sbr.rel (0) target = $region21
    $region20: #{tpu_custom_call.1} parent=1 // pred_region
      _
    $region21: #{tpu_custom_call.1} parent=1 // pred_fallthru
      _
    // Predicated region
    $region22: #{tpu_custom_call.1} parent=1 // pred_check
      _
    $region23: #{tpu_custom_call.1} parent=1 // pred_check_branch
      %55 = sbr.rel (0) target = $region25
    $region24: #{tpu_custom_call.1} parent=1 // pred_region
      %s57 = ssub.s32 1024, 1024
      %58 = vsyncadd [#allocation9], %s57
      %s59 = sshll.u32 [#allocation8], 4
      %s60 = int_to_ptr.vmem [resolvable:$true] %s59
      %65 = dma.hbm_to_vmem [thread:$0]  %s5, 1024, %s60, [#allocation9], 64, 64, 4
    $region25: #{tpu_custom_call.1} parent=1 // pred_fallthru
      _
    // Predicated region
    $region26: #{tpu_custom_call.1} parent=1 // pred_check
      _
    $region27: #{tpu_custom_call.1} parent=1 // pred_check_branch
      %67 = sbr.rel (0) target = $region29
    $region28: #{tpu_custom_call.1} parent=1 // pred_region
      _
    $region29: #{tpu_custom_call.1} parent=1 // pred_fallthru
      _
    // Predicated region
    $region30: #{tpu_custom_call.1} parent=1 // pred_check
      _
    $region31: #{tpu_custom_call.1} parent=1 // pred_check_branch
      %69 = sbr.rel (0) target = $region33
    $region32: #{tpu_custom_call.1} parent=1 // pred_region
      %70 = dma.done [#allocation3], 128
    $region33: #{tpu_custom_call.1} parent=1 // pred_fallthru
      _
    // Predicated region
    $region34: #{tpu_custom_call.1} parent=1 // pred_check
      _
    $region35: #{tpu_custom_call.1} parent=1 // pred_check_branch
      %72 = sbr.rel (0) target = $region37
    $region36: #{tpu_custom_call.1} parent=1 // pred_region
      %73 = dma.done [#allocation6], 256
    $region37: #{tpu_custom_call.1} parent=1 // pred_fallthru
      _
    // Predicated region
    $region38: #{tpu_custom_call.1} parent=1 // pred_check
      _
    $region39: #{tpu_custom_call.1} parent=1 // pred_check_branch
      %75 = sbr.rel (0) target = $region41
    $region40: #{tpu_custom_call.1} parent=1 // pred_region
      %76 = dma.done [#allocation6], 1024
    $region41: #{tpu_custom_call.1} parent=1 // pred_fallthru
      _
    // Predicated region
    $region42: #{tpu_custom_call.1} parent=1 // pred_check
      _
    $region43: #{tpu_custom_call.1} parent=1 // pred_check_branch
      %78 = sbr.rel (0) target = $region45
    $region44: #{tpu_custom_call.1} parent=1 // pred_region
      %79 = dma.done [#allocation9], 1024
    $region45: #{tpu_custom_call.1} parent=1 // pred_fallthru
      _
    %v81 = vld [vmem:[%s2] sm:$0x1]
    %v82 = vld [vmem:[%s4] sm:$0x1]
    %v83 = vld [vmem:[%s6] sm:$0x1]
    %v84 = vld [vmem:[#allocation2] sm:$0xff]
    %v85 = vpack.c.bf16 %v84, %v84
    %v86 = vld [vmem:[#allocation5] sm:$0xf]
    %v87 = vld [vmem:[#allocation5 + $0x4] sm:$0xf]
    %v88 = vld [vmem:[#allocation5 + $0x8] sm:$0xf]
    %v89 = vld [vmem:[#allocation5 + $0xc] sm:$0xf]
    %v91 = vlaneseq
    %v92 = vshrl.u32 %v91, 7
    %v93 = vsub.s32 0, %v92
    %v94 = vrot.slane %v81, %v93
    %v100 = vunpack.c.l.b16 %v86
    %v101 = vunpack.c.l.b16 %v87
    %v102 = vunpack.c.l.b16 %v88
    %v103 = vunpack.c.l.b16 %v89
    %v104 = vpack.c.b16 %v101, %v100
    %v105 = vpack.c.b16 %v103, %v102
    %vm108 = vcmask 261120
    %v110 = vsel %vm108, %v85, 0
    %112 = vmatprep.subr.bf16.mxu0 0
    %113 = vmatpush1.bf16.msra.mxu0 %v104
    %114 = vmatprep.subr.bf16.mxu0 0
    %115 = vmatpush1.bf16.msra.mxu0 %v105
    %116 = vmatprep.subr.bf16.mxu0 0
    %117 = vmatpush1.bf16.msra.mxu0 0
    %118 = vmatprep.subr.bf16.mxu0 0
    %119 = vmatpush1.bf16.msra.mxu0 0
    %120 = vmatprep.subr.bf16.mxu0 0
    %121 = vmatpush1.bf16.msra.mxu0 0
    %122 = vmatprep.subr.bf16.mxu0 0
    %123 = vmatpush1.bf16.msra.mxu0 0
    %124 = vmatprep.subr.bf16.mxu0 0
    %125 = vmatpush1.bf16.msra.mxu0 0
    %126 = vmatprep.subr.bf16.mxu0 0
    %127 = vmatpush1.bf16.msra.mxu0 0
    %128 = vmatprep.subr.bf16.mxu0 0
    %129 = vmatpush1.bf16.msra.mxu0 0
    %130 = vmatprep.subr.bf16.mxu0 0
    %131 = vmatpush1.bf16.msra.mxu0 0
    %132 = vmatprep.subr.bf16.mxu0 0
    %133 = vmatpush1.bf16.msra.mxu0 0
    %134 = vmatprep.subr.bf16.mxu0 0
    %135 = vmatpush1.bf16.msra.mxu0 0
    %136 = vmatprep.subr.bf16.mxu0 0
    %137 = vmatpush1.bf16.msra.mxu0 0
    %138 = vmatprep.subr.bf16.mxu0 0
    %139 = vmatpush1.bf16.msra.mxu0 0
    %140 = vmatprep.subr.bf16.mxu0 0
    %141 = vmatpush1.bf16.msra.mxu0 0
    %142 = vmatprep.subr.bf16.mxu0 0
    %143 = vmatpush1.bf16.msra.mxu0 0
    %144 = vmatprep.mubr.bf16.mxu0 0
    %145 = vmatmul.mubr.bf16.gmra.mrb[0].mxu0 %v110
    %v146 = vpop.f32.mrb[0].mxu0
    %v147 = vadd.f32 %v94, %v146
    %v148 = vpop.f32.mrb[0].mxu0
    %v149 = vpop.f32.mrb[0].mxu0
    %v150 = vpop.f32.mrb[0].mxu0
    %151 = vdwg.mxu0
    %vm152 = vcmp.ge.f32.partialorder %v147, 0.0
    %v153 = vmul.f32 %v147, 0.01
    %v154 = vsel %vm152, %v147, %v153
    %v155 = vpack.c.bf16 %v154, %v154
    %v156 = vld [vmem:[#allocation7] sm:$0xf]
    %v157 = vld [vmem:[#allocation7 + $0x4] sm:$0xf]
    %v158 = vld [vmem:[#allocation7 + $0x8] sm:$0xf]
    %v159 = vld [vmem:[#allocation7 + $0xc] sm:$0xf]
    %v160 = vld [vmem:[#allocation7 + $0x10] sm:$0xf]
    %v161 = vld [vmem:[#allocation7 + $0x14] sm:$0xf]
    %v162 = vld [vmem:[#allocation7 + $0x18] sm:$0xf]
    %v163 = vld [vmem:[#allocation7 + $0x1c] sm:$0xf]
    %v164 = vld [vmem:[#allocation7 + $0x20] sm:$0xf]
    %v165 = vld [vmem:[#allocation7 + $0x24] sm:$0xf]
    %v166 = vld [vmem:[#allocation7 + $0x28] sm:$0xf]
    %v167 = vld [vmem:[#allocation7 + $0x2c] sm:$0xf]
    %v168 = vld [vmem:[#allocation7 + $0x30] sm:$0xf]
    %v169 = vld [vmem:[#allocation7 + $0x34] sm:$0xf]
    %v170 = vld [vmem:[#allocation7 + $0x38] sm:$0xf]
    %v171 = vld [vmem:[#allocation7 + $0x3c] sm:$0xf]
    %v173 = vlaneseq
    %v174 = vshrl.u32 %v173, 7
    %v175 = vsub.s32 0, %v174
    %v176 = vrot.slane %v82, %v175
    %v194 = vunpack.c.l.b16 %v156
    %v195 = vunpack.c.l.b16 %v157
    %v196 = vunpack.c.l.b16 %v158
    %v197 = vunpack.c.l.b16 %v159
    %v198 = vunpack.c.l.b16 %v160
    %v199 = vunpack.c.l.b16 %v161
    %v200 = vunpack.c.l.b16 %v162
    %v201 = vunpack.c.l.b16 %v163
    %v202 = vunpack.c.l.b16 %v164
    %v203 = vunpack.c.l.b16 %v165
    %v204 = vunpack.c.l.b16 %v166
    %v205 = vunpack.c.l.b16 %v167
    %v206 = vunpack.c.l.b16 %v168
    %v207 = vunpack.c.l.b16 %v169
    %v208 = vunpack.c.l.b16 %v170
    %v209 = vunpack.c.l.b16 %v171
    %v210 = vpack.c.b16 %v195, %v194
    %v211 = vpack.c.b16 %v197, %v196
    %v212 = vpack.c.b16 %v199, %v198
    %v213 = vpack.c.b16 %v201, %v200
    %v214 = vpack.c.b16 %v203, %v202
    %v215 = vpack.c.b16 %v205, %v204
    %v216 = vpack.c.b16 %v207, %v206
    %v217 = vpack.c.b16 %v209, %v208
    %226 = vmatprep.subr.bf16.mxu0 0
    %227 = vmatpush1.bf16.msra.mxu0 %v210
    %228 = vmatprep.subr.bf16.mxu0 0
    %229 = vmatpush1.bf16.msra.mxu0 %v211
    %230 = vmatprep.subr.bf16.mxu0 0
    %231 = vmatpush1.bf16.msra.mxu0 %v212
    %232 = vmatprep.subr.bf16.mxu0 0
    %233 = vmatpush1.bf16.msra.mxu0 %v213
    %234 = vmatprep.subr.bf16.mxu0 0
    %235 = vmatpush1.bf16.msra.mxu0 %v214
    %236 = vmatprep.subr.bf16.mxu0 0
    %237 = vmatpush1.bf16.msra.mxu0 %v215
    %238 = vmatprep.subr.bf16.mxu0 0
    %239 = vmatpush1.bf16.msra.mxu0 %v216
    %240 = vmatprep.subr.bf16.mxu0 0
    %241 = vmatpush1.bf16.msra.mxu0 %v217
    %242 = vmatprep.subr.bf16.mxu0 0
    %243 = vmatpush1.bf16.msra.mxu0 0
    %244 = vmatprep.subr.bf16.mxu0 0
    %245 = vmatpush1.bf16.msra.mxu0 0
    %246 = vmatprep.subr.bf16.mxu0 0
    %247 = vmatpush1.bf16.msra.mxu0 0
    %248 = vmatprep.subr.bf16.mxu0 0
    %249 = vmatpush1.bf16.msra.mxu0 0
    %250 = vmatprep.subr.bf16.mxu0 0
    %251 = vmatpush1.bf16.msra.mxu0 0
    %252 = vmatprep.subr.bf16.mxu0 0
    %253 = vmatpush1.bf16.msra.mxu0 0
    %254 = vmatprep.subr.bf16.mxu0 0
    %255 = vmatpush1.bf16.msra.mxu0 0
    %256 = vmatprep.subr.bf16.mxu0 0
    %257 = vmatpush1.bf16.msra.mxu0 0
    %258 = vmatprep.mubr.bf16.mxu0 0
    %259 = vmatmul.mubr.bf16.gmra.mrb[0].mxu0 %v155
    %v260 = vpop.f32.mrb[0].mxu0
    %v261 = vadd.f32 %v176, %v260
    %v262 = vpop.f32.mrb[0].mxu0
    %v263 = vpop.f32.mrb[0].mxu0
    %v264 = vpop.f32.mrb[0].mxu0
    %265 = vdwg.mxu0
    %vm266 = vcmp.ge.f32.partialorder %v261, 0.0
    %v267 = vmul.f32 %v261, 0.01
    %v268 = vsel %vm266, %v261, %v267
    %v269 = vpack.c.bf16 %v268, %v268
    %v270 = vld [vmem:[#allocation8] sm:$0xf]
    %v271 = vld [vmem:[#allocation8 + $0x4] sm:$0xf]
    %v272 = vld [vmem:[#allocation8 + $0x8] sm:$0xf]
    %v273 = vld [vmem:[#allocation8 + $0xc] sm:$0xf]
    %v274 = vld [vmem:[#allocation8 + $0x10] sm:$0xf]
    %v275 = vld [vmem:[#allocation8 + $0x14] sm:$0xf]
    %v276 = vld [vmem:[#allocation8 + $0x18] sm:$0xf]
    %v277 = vld [vmem:[#allocation8 + $0x1c] sm:$0xf]
    %v278 = vld [vmem:[#allocation8 + $0x20] sm:$0xf]
    %v279 = vld [vmem:[#allocation8 + $0x24] sm:$0xf]
    %v280 = vld [vmem:[#allocation8 + $0x28] sm:$0xf]
    %v281 = vld [vmem:[#allocation8 + $0x2c] sm:$0xf]
    %v282 = vld [vmem:[#allocation8 + $0x30] sm:$0xf]
    %v283 = vld [vmem:[#allocation8 + $0x34] sm:$0xf]
    %v284 = vld [vmem:[#allocation8 + $0x38] sm:$0xf]
    %v285 = vld [vmem:[#allocation8 + $0x3c] sm:$0xf]
    %v287 = vlaneseq
    %v288 = vshrl.u32 %v287, 7
    %v289 = vsub.s32 0, %v288
    %v290 = vrot.slane %v83, %v289
    %v308 = vunpack.c.l.b16 %v270
    %v309 = vunpack.c.l.b16 %v271
    %v310 = vunpack.c.l.b16 %v272
    %v311 = vunpack.c.l.b16 %v273
    %v312 = vunpack.c.l.b16 %v274
    %v313 = vunpack.c.l.b16 %v275
    %v314 = vunpack.c.l.b16 %v276
    %v315 = vunpack.c.l.b16 %v277
    %v316 = vunpack.c.l.b16 %v278
    %v317 = vunpack.c.l.b16 %v279
    %v318 = vunpack.c.l.b16 %v280
    %v319 = vunpack.c.l.b16 %v281
    %v320 = vunpack.c.l.b16 %v282
    %v321 = vunpack.c.l.b16 %v283
    %v322 = vunpack.c.l.b16 %v284
    %v323 = vunpack.c.l.b16 %v285
    %v324 = vpack.c.b16 %v309, %v308
    %v325 = vpack.c.b16 %v311, %v310
    %v326 = vpack.c.b16 %v313, %v312
    %v327 = vpack.c.b16 %v315, %v314
    %v328 = vpack.c.b16 %v317, %v316
    %v329 = vpack.c.b16 %v319, %v318
    %v330 = vpack.c.b16 %v321, %v320
    %v331 = vpack.c.b16 %v323, %v322
    %340 = vmatprep.subr.bf16.mxu0 0
    %341 = vmatpush1.bf16.msra.mxu0 %v324
    %342 = vmatprep.subr.bf16.mxu0 0
    %343 = vmatpush1.bf16.msra.mxu0 %v325
    %344 = vmatprep.subr.bf16.mxu0 0
    %345 = vmatpush1.bf16.msra.mxu0 %v326
    %346 = vmatprep.subr.bf16.mxu0 0
    %347 = vmatpush1.bf16.msra.mxu0 %v327
    %348 = vmatprep.subr.bf16.mxu0 0
    %349 = vmatpush1.bf16.msra.mxu0 %v328
    %350 = vmatprep.subr.bf16.mxu0 0
    %351 = vmatpush1.bf16.msra.mxu0 %v329
    %352 = vmatprep.subr.bf16.mxu0 0
    %353 = vmatpush1.bf16.msra.mxu0 %v330
    %354 = vmatprep.subr.bf16.mxu0 0
    %355 = vmatpush1.bf16.msra.mxu0 %v331
    %356 = vmatprep.subr.bf16.mxu0 0
    %357 = vmatpush1.bf16.msra.mxu0 0
    %358 = vmatprep.subr.bf16.mxu0 0
    %359 = vmatpush1.bf16.msra.mxu0 0
    %360 = vmatprep.subr.bf16.mxu0 0
    %361 = vmatpush1.bf16.msra.mxu0 0
    %362 = vmatprep.subr.bf16.mxu0 0
    %363 = vmatpush1.bf16.msra.mxu0 0
    %364 = vmatprep.subr.bf16.mxu0 0
    %365 = vmatpush1.bf16.msra.mxu0 0
    %366 = vmatprep.subr.bf16.mxu0 0
    %367 = vmatpush1.bf16.msra.mxu0 0
    %368 = vmatprep.subr.bf16.mxu0 0
    %369 = vmatpush1.bf16.msra.mxu0 0
    %370 = vmatprep.subr.bf16.mxu0 0
    %371 = vmatpush1.bf16.msra.mxu0 0
    %372 = vmatprep.mubr.bf16.mxu0 0
    %373 = vmatmul.mubr.bf16.gmra.mrb[0].mxu0 %v269
    %v374 = vpop.f32.mrb[0].mxu0
    %v375 = vadd.f32 %v290, %v374
    %v376 = vpop.f32.mrb[0].mxu0
    %v377 = vpop.f32.mrb[0].mxu0
    %v378 = vpop.f32.mrb[0].mxu0
    %379 = vdwg.mxu0
    %v380 = vmax.f32 %v375, 0.0
    %381 = vst [vmem:[#allocation10] sm:$0xff] %v380
    // Predicated region
    $region46: #{tpu_custom_call.1} parent=1 // pred_check
      _
    $region47: #{tpu_custom_call.1} parent=1 // pred_check_branch
      %383 = sbr.rel (0) target = $region49
    $region48: #{tpu_custom_call.1} parent=1 // pred_region
      %s385 = ssub.s32 128, 128
      %386 = vsyncadd [#allocation4], %s385
      %s388 = sshll.u32 [#allocation10], 4
      %s389 = int_to_ptr.vmem [resolvable:$true] %s388
      %391 = dma.vmem_to_hbm [thread:$0]  %s389, 128, %s7, [#allocation4]
    $region49: #{tpu_custom_call.1} parent=1 // pred_fallthru
      _
    // Predicated region
    $region50: #{tpu_custom_call.1} parent=1 // pred_check
      _
    $region51: #{tpu_custom_call.1} parent=1 // pred_check_branch
      %393 = sbr.rel (0) target = $region53
    $region52: #{tpu_custom_call.1} parent=1 // pred_region
      %394 = dma.done [#allocation4], 128
    $region53: #{tpu_custom_call.1} parent=1 // pred_fallthru
      _
    %395 = vsyncpa [#allocation3], 1
    %396 = vsyncpa [#allocation6], 1
    %397 = vsyncpa [#allocation9], 1
    %398 = vsyncpa [#allocation4], 1

</llo_original>
